<compile_context>
chip_gen: v7x
topology: tpu7x:2x2x1
jax: 0.10.0
libtpu: 0.0.40
codegen_flags: <defaults>
</compile_context>

<pallas_src>
import jax
import jax.numpy as jnp
from jax.experimental import pallas as pl
from jax.experimental.pallas import tpu as pltpu


# ---------------------------------------------------------------------------
# Tiling heuristics
# ---------------------------------------------------------------------------

_TARGET_STEP_BYTES = 4 << 20   # per-step HBM traffic target (>> ~0.35us step cost)
_VMEM_BUDGET = 40 << 20        # double-buffered footprint cap (v7x: 64 MiB VMEM/TC)
_MAX_BATCH_FOLD = 8            # bounds the static unroll inside the kernel


def _choose_tiles(N, HW, C_in, C_out, itemsize):
    """Pick (batch_fold, spatial_tile, vmem_footprint_bytes)."""
    acc_extra = 4 if itemsize < 4 else 0   # f32 accumulator behind a narrow output

    def vmem_bytes(nb, t):
        # x + y tiles are double-buffered by the Pallas pipeline, plus the
        # f32 accumulator temp when the output dtype is narrower than f32.
        return nb * t * (2 * (C_in + C_out) * itemsize + C_out * acc_extra)

    def hbm_bytes(nb, t):
        return nb * t * (C_in + C_out) * itemsize

    # 1) Spatial tile: full extent if it fits the VMEM budget, else the
    #    largest power-of-two multiple of 128 that does (or that reaches the
    #    per-step traffic target).
    if vmem_bytes(1, HW) <= _VMEM_BUDGET:
        t_hw = HW
    else:
        t_hw = 128
        while (2 * t_hw < HW
               and vmem_bytes(1, 2 * t_hw) <= _VMEM_BUDGET
               and hbm_bytes(1, t_hw) < _TARGET_STEP_BYTES):
            t_hw *= 2

    # 2) Fold several batches into one block when a single full-HW step is
    #    still far below the per-step traffic target (GWNET's HW ~ 2-3K).
    nb = 1
    while (t_hw == HW
           and nb < min(N, _MAX_BATCH_FOLD)
           and hbm_bytes(nb, t_hw) < _TARGET_STEP_BYTES
           and vmem_bytes(2 * nb, t_hw) <= _VMEM_BUDGET):
        nb *= 2
    nb = min(nb, N)

    # 3) Megacore / pipeline sanity: keep >= 4 grid steps when the total data
    #    is big enough that splitting it is still above the overhead floor.
    def n_steps(nb_):
        return pl.cdiv(N, nb_) * pl.cdiv(HW, t_hw)

    while (nb > 1 and n_steps(nb) < 4
           and hbm_bytes(nb // 2, t_hw) >= _TARGET_STEP_BYTES // 2):
        nb //= 2

    return nb, t_hw, vmem_bytes(nb, t_hw)


# ---------------------------------------------------------------------------
# Kernel
# ---------------------------------------------------------------------------

def _make_kernel(nb, precision):
    """MXU kernel over a (nb, C_in, T) input block -> (nb, C_out, T) output."""

    def kernel(x_ref, w_ref, b_ref, o_ref):
        # x_ref: (nb, C_in, T)  w_ref: (C_out, C_in)  b_ref: (C_out, 1)
        # o_ref: (nb, C_out, T)
        w = w_ref[...]
        b = b_ref[...].astype(jnp.float32)
        for i in range(nb):                      # small static unroll (<= 8)
            acc = jnp.dot(w, x_ref[i],
                          precision=precision,
                          preferred_element_type=jnp.float32)
            o_ref[i] = (acc + b).astype(o_ref.dtype)

    return kernel


# ---------------------------------------------------------------------------
# Wrapper
# ---------------------------------------------------------------------------

def linear_1x1_conv(x_nchw, weight, bias):
    """Equivalent of nn.Conv2d(c_in, c_out, kernel_size=(1,1), bias=True).

    x_nchw : (N, C_in, H, W)
    weight : (C_out, C_in, 1, 1)   (PyTorch conv weight layout)
    bias   : (C_out,)
    returns: (N, C_out, H, W)
    """
    N, C_in, H, W = x_nchw.shape
    C_out = weight.shape[0]
    HW = H * W
    out_dtype = x_nchw.dtype
    itemsize = jnp.dtype(out_dtype).itemsize

    # Free reshapes only (contiguous NCHW) -- no HBM transpose passes.
    x3 = x_nchw.reshape(N, C_in, HW)
    w_mat = weight.reshape(C_out, C_in).astype(out_dtype)
    b_col = bias.reshape(C_out, 1).astype(jnp.float32)

    nb, t_hw, vmem_need = _choose_tiles(N, HW, C_in, C_out, itemsize)
    grid = (pl.cdiv(N, nb), pl.cdiv(HW, t_hw))   # ragged tails -> masked blocks

    # PyTorch-parity numerics for f32 inputs; extra MXU passes hide under DMA.
    precision = (jax.lax.Precision.HIGHEST
                 if out_dtype == jnp.float32 else jax.lax.Precision.DEFAULT)
    kernel = _make_kernel(nb, precision)

    x_spec = pl.BlockSpec((nb, C_in, t_hw), lambda b, t: (b, 0, t))
    w_spec = pl.BlockSpec((C_out, C_in), lambda b, t: (0, 0))       # resident
    b_spec = pl.BlockSpec((C_out, 1), lambda b, t: (0, 0))          # resident
    o_spec = pl.BlockSpec((nb, C_out, t_hw), lambda b, t: (b, 0, t))

    # Explicit scoped-VMEM limit so the 16/32 MiB defaults never cap the tile
    # choice; stays <= 48 MiB so it is also legal on v7x (64 MiB per TC).
    vmem_limit = int(min(48 << 20, max(vmem_need + (8 << 20), 32 << 20)))

    cost = pl.CostEstimate(
        flops=2 * N * HW * C_in * C_out,
        transcendentals=0,
        bytes_accessed=(N * C_in * HW * itemsize          # x read
                        + N * C_out * HW * itemsize       # y write
                        + C_out * C_in * itemsize         # weight
                        + C_out * 4),                     # bias
    )

    out3 = pl.pallas_call(
        kernel,
        out_shape=jax.ShapeDtypeStruct((N, C_out, HW), out_dtype),
        grid=grid,
        in_specs=[x_spec, w_spec, b_spec],
        out_specs=o_spec,
        compiler_params=pltpu.CompilerParams(
            dimension_semantics=("parallel", "parallel"),
            vmem_limit_bytes=vmem_limit,
        ),
        cost_estimate=cost,
    )(x3, w_mat, b_col)

    return out3.reshape(N, C_out, H, W)


# ---------------------------------------------------------------------------
# Self-test
# ---------------------------------------------------------------------------

if __name__ == "__main__":
    key = jax.random.PRNGKey(0)
    kx, kw, kb, kx2, kw2, kb2 = jax.random.split(key, 6)

    # Case 1: tiny channels (as in GWNET's small Linear layers / the demo).
    N, C_in, C_out, H, W = 2, 4, 8, 16, 16
    x = jax.random.normal(kx, (N, C_in, H, W), dtype=jnp.float32)
    weight = jax.random.normal(kw, (C_out, C_in, 1, 1), dtype=jnp.float32) * 0.1
    bias = jax.random.normal(kb, (C_out,), dtype=jnp.float32) * 0.1

    y = jax.block_until_ready(linear_1x1_conv(x, weight, bias))
    ref = jnp.einsum("nchw,oc->nohw", x, weight.reshape(C_out, C_in),
                     precision=jax.lax.Precision.HIGHEST) \
        + bias.reshape(1, C_out, 1, 1)
    assert y.shape == (N, C_out, H, W)
    assert jnp.allclose(y, ref, atol=1e-5, rtol=1e-5)

    # Case 2: larger channels, as used elsewhere in GWNET.
    N2, C_in2, C_out2, H2, W2 = 2, 32, 64, 16, 16
    x2 = jax.random.normal(kx2, (N2, C_in2, H2, W2), dtype=jnp.float32)
    w2 = jax.random.normal(kw2, (C_out2, C_in2, 1, 1), dtype=jnp.float32) * 0.1
    b2 = jax.random.normal(kb2, (C_out2,), dtype=jnp.float32) * 0.1

    y2 = jax.block_until_ready(linear_1x1_conv(x2, w2, b2))
    ref2 = jnp.einsum("nchw,oc->nohw", x2, w2.reshape(C_out2, C_in2),
                      precision=jax.lax.Precision.HIGHEST) \
        + b2.reshape(1, C_out2, 1, 1)
    assert y2.shape == (N2, C_out2, H2, W2)
    # MXU path now runs at Precision.HIGHEST -> tight tolerance vs f32 ref.
    assert jnp.allclose(y2, ref2, atol=1e-4, rtol=1e-4)

    print("KERNEL_OK")
</pallas_src>

<mosaic_0001>
module attributes {stable_mosaic.version = 11 : i64} {
  func.func @kernel(%arg0: i32, %arg1: i32, %arg2: memref<2x4x256xf32, #tpu.memory_space<vmem>>, %arg3: memref<8x4xf32, #tpu.memory_space<vmem>>, %arg4: memref<8x1xf32, #tpu.memory_space<vmem>>, %arg5: memref<2x8x256xf32, #tpu.memory_space<vmem>>) attributes {dimension_semantics = [#tpu.dimension_semantics<parallel>, #tpu.dimension_semantics<parallel>], iteration_bounds = array<i64: 1, 1>, scalar_prefetch = 0 : i64, scratch_operands = 0 : i64, tpu.core_type = #tpu.core_type<tc>, window_params = [{transform_indices = @transform_0, window_bounds = array<i64: 2, 4, 256>}, {pipeline_mode = #tpu.pipeline_mode<synchronous>, transform_indices = @transform_1, window_bounds = array<i64: 8, 4>}, {pipeline_mode = #tpu.pipeline_mode<synchronous>, transform_indices = @transform_2, window_bounds = array<i64: 8, 1>}, {transform_indices = @transform_3, window_bounds = array<i64: 2, 8, 256>}]} {
    %c0 = arith.constant 0 : index
    %c0_0 = arith.constant 0 : index
    %0 = vector.load %arg3[%c0, %c0_0] : memref<8x4xf32, #tpu.memory_space<vmem>>, vector<8x4xf32>
    %c0_1 = arith.constant 0 : index
    %c0_2 = arith.constant 0 : index
    %1 = vector.load %arg4[%c0_1, %c0_2] : memref<8x1xf32, #tpu.memory_space<vmem>>, vector<8x1xf32>
    %c0_3 = arith.constant 0 : index
    %c0_4 = arith.constant 0 : index
    %c0_5 = arith.constant 0 : index
    %2 = vector.load %arg2[%c0_3, %c0_4, %c0_5] : memref<2x4x256xf32, #tpu.memory_space<vmem>>, vector<1x4x256xf32>
    %3 = vector.shape_cast %2 : vector<1x4x256xf32> to vector<4x256xf32>
    %cst = arith.constant dense<0.000000e+00> : vector<8x256xf32>
    %4 = tpu.matmul %0, %3, %cst {dimension_numbers = #tpu.dot_dimension_numbers<[1], [0], [0], [1], [0, 0, 1, 1], [], []>, precision = #tpu.contract_precision<fp32>} : vector<8x4xf32>, vector<4x256xf32>, vector<8x256xf32> -> vector<8x256xf32>
    %5 = vector.broadcast %1 : vector<8x1xf32> to vector<8x256xf32>
    %6 = arith.addf %4, %5 : vector<8x256xf32>
    %c0_6 = arith.constant 0 : index
    %c0_7 = arith.constant 0 : index
    %c0_8 = arith.constant 0 : index
    %7 = vector.load %arg5[%c0_6, %c0_7, %c0_8] : memref<2x8x256xf32, #tpu.memory_space<vmem>>, vector<1x8x256xf32>
    %8 = vector.shape_cast %7 : vector<1x8x256xf32> to vector<8x256xf32>
    %9 = vector.shape_cast %6 : vector<8x256xf32> to vector<1x8x256xf32>
    tpu.vector_store %arg5[%c0_6, %c0_7, %c0_8], %9 {strides = array<i32>} : memref<2x8x256xf32, #tpu.memory_space<vmem>>, vector<1x8x256xf32>,
    %c1 = arith.constant 1 : index
    %c0_9 = arith.constant 0 : index
    %c0_10 = arith.constant 0 : index
    %10 = vector.load %arg2[%c1, %c0_9, %c0_10] : memref<2x4x256xf32, #tpu.memory_space<vmem>>, vector<1x4x256xf32>
    %11 = vector.shape_cast %10 : vector<1x4x256xf32> to vector<4x256xf32>
    %cst_11 = arith.constant dense<0.000000e+00> : vector<8x256xf32>
    %12 = tpu.matmul %0, %11, %cst_11 {dimension_numbers = #tpu.dot_dimension_numbers<[1], [0], [0], [1], [0, 0, 1, 1], [], []>, precision = #tpu.contract_precision<fp32>} : vector<8x4xf32>, vector<4x256xf32>, vector<8x256xf32> -> vector<8x256xf32>
    %13 = vector.broadcast %1 : vector<8x1xf32> to vector<8x256xf32>
    %14 = arith.addf %12, %13 : vector<8x256xf32>
    %c1_12 = arith.constant 1 : index
    %c0_13 = arith.constant 0 : index
    %c0_14 = arith.constant 0 : index
    %15 = vector.load %arg5[%c1_12, %c0_13, %c0_14] : memref<2x8x256xf32, #tpu.memory_space<vmem>>, vector<1x8x256xf32>
    %16 = vector.shape_cast %15 : vector<1x8x256xf32> to vector<8x256xf32>
    %17 = vector.shape_cast %14 : vector<8x256xf32> to vector<1x8x256xf32>
    tpu.vector_store %arg5[%c1_12, %c0_13, %c0_14], %17 {strides = array<i32>} : memref<2x8x256xf32, #tpu.memory_space<vmem>>, vector<1x8x256xf32>,
    return
  }
  func.func @transform_0(%arg0: i32, %arg1: i32) -> (i32, i32, i32) {
    %c0_i32 = arith.constant 0 : i32
    %c0_i32_0 = arith.constant 0 : i32
    return %arg0, %c0_i32, %arg1 : i32, i32, i32
  }
  func.func @transform_1(%arg0: i32, %arg1: i32) -> (i32, i32) {
    %c0_i32 = arith.constant 0 : i32
    %c0_i32_0 = arith.constant 0 : i32
    %c0_i32_1 = arith.constant 0 : i32
    return %c0_i32, %c0_i32_0 : i32, i32
  }
  func.func @transform_2(%arg0: i32, %arg1: i32) -> (i32, i32) {
    %c0_i32 = arith.constant 0 : i32
    %c0_i32_0 = arith.constant 0 : i32
    %c0_i32_1 = arith.constant 0 : i32
    return %c0_i32, %c0_i32_0 : i32, i32
  }
  func.func @transform_3(%arg0: i32, %arg1: i32) -> (i32, i32, i32) {
    %c0_i32 = arith.constant 0 : i32
    %c0_i32_0 = arith.constant 0 : i32
    return %arg0, %c0_i32, %arg1 : i32, i32, i32
  }
}

</mosaic_0001>

<llo_original>
// kernel: tpu_custom_call.1
$region0: #{tpu_custom_call.1}
  #allocation0 [shape = 'u32[]', space=smem, size = 0x4, offset = 0x4, fixed_abs, tag = 'smem constant byte address 0x4 - core index']
  #allocation1 [shape = 'u32[144,128]{1,0:T(1,128)}', space=vmem, size = 0x12000, scoped, tag = 'internal scratch']
  %s0 = inlined_call_operand.vmem [shape: f32[2,4,256], index: 0, kind: input, shape index: {}]
  %s1 = inlined_call_operand.vmem [shape: f32[8,4], index: 1, kind: input, shape index: {}]
  %s2 = inlined_call_operand.vmem [shape: f32[8,1], index: 2, kind: input, shape index: {}]
  %s3 = inlined_call_operand.hbm [shape: f32[2,8,256], index: 3, kind: output, shape index: {}]
  %s4 = sld [smem:[#allocation0]]
  $region22: #{tpu_custom_call.1} parent=0
    _
  %s6 = ssub.s32 1, %s4
  %s7 = scalar_select 0, %s6, %s4
  $region1: #{tpu_custom_call.1} parent=0
    #allocation2 [shape = 'u8[16384]{0}', space=vmem, size = 0x4000, scoped, tag = 'output window, operand 0, single buffered']
    #allocation3 [shape = 's32[1]{0}', space=sflag, size = 0x4, scoped, tag = 'scoped memory for tpu_custom_call.1']
    %8 = vsyncpa [#allocation3], 0
    // Predicated region
    $region2: #{tpu_custom_call.1} parent=1 // pred_check
      _
    $region3: #{tpu_custom_call.1} parent=1 // pred_check_branch
      %10 = sbr.rel (0) target = $region5
    $region4: #{tpu_custom_call.1} parent=1 // pred_region
      _
    $region5: #{tpu_custom_call.1} parent=1 // pred_fallthru
      _
    // Predicated region
    $region6: #{tpu_custom_call.1} parent=1 // pred_check
      _
    $region7: #{tpu_custom_call.1} parent=1 // pred_check_branch
      %12 = sbr.rel (0) target = $region9
    $region8: #{tpu_custom_call.1} parent=1 // pred_region
      _
    $region9: #{tpu_custom_call.1} parent=1 // pred_fallthru
      _
    // Predicated region
    $region10: #{tpu_custom_call.1} parent=1 // pred_check
      _
    $region11: #{tpu_custom_call.1} parent=1 // pred_check_branch
      %14 = sbr.rel (0) target = $region13
    $region12: #{tpu_custom_call.1} parent=1 // pred_region
      _
    $region13: #{tpu_custom_call.1} parent=1 // pred_fallthru
      _
    %v15 = vld [vmem:[%s1] sm:$0xff]
    %v16 = vld [vmem:[%s2] sm:$0xff]
    %v17 = vld [vmem:[%s0] sm:$0xff]
    %19 = vset.pattern.permute.xlu0 0
    %20 = vperm.xlu0 %19, %v16
    %v21 = vpop.permute.xlu0 %20
    %v24 = vcombine.high %v17, %v17
    %vm25 = vcmask 31744
    %v27 = vsel %vm25, %v15, 0
    %vm29 = vcmask 1043456
    %v30 = vsel %vm29, %v17, 0
    %v32 = vsel %vm29, %v24, 0
    %v34 = vand.u32 %v32, 4294901760
    %35 = vmatprep.subr.mxu0 %v34
    %v36 = vand.u32 %v30, 4294901760
    %37 = vmatpush1.msra.mxu0 %v36
    %38 = vmatprep.subr.mxu0 0.0
    %39 = vmatpush1.msra.mxu0 0.0
    %40 = vmatprep.subr.mxu0 0.0
    %41 = vmatpush1.msra.mxu0 0.0
    %42 = vmatprep.subr.mxu0 0.0
    %43 = vmatpush1.msra.mxu0 0.0
    %44 = vmatprep.subr.mxu0 0.0
    %45 = vmatpush1.msra.mxu0 0.0
    %46 = vmatprep.subr.mxu0 0.0
    %47 = vmatpush1.msra.mxu0 0.0
    %48 = vmatprep.subr.mxu0 0.0
    %49 = vmatpush1.msra.mxu0 0.0
    %50 = vmatprep.subr.mxu0 0.0
    %51 = vmatpush1.msra.mxu0 0.0
    %52 = vmatprep.subr.mxu0 0.0
    %53 = vmatpush1.msra.mxu0 0.0
    %54 = vmatprep.subr.mxu0 0.0
    %55 = vmatpush1.msra.mxu0 0.0
    %56 = vmatprep.subr.mxu0 0.0
    %57 = vmatpush1.msra.mxu0 0.0
    %58 = vmatprep.subr.mxu0 0.0
    %59 = vmatpush1.msra.mxu0 0.0
    %60 = vmatprep.subr.mxu0 0.0
    %61 = vmatpush1.msra.mxu0 0.0
    %62 = vmatprep.subr.mxu0 0.0
    %63 = vmatpush1.msra.mxu0 0.0
    %64 = vmatprep.subr.mxu0 0.0
    %65 = vmatpush1.msra.mxu0 0.0
    %66 = vmatprep.subr.mxu0 0.0
    %67 = vmatpush1.msra.mxu0 0.0
    %68 = vmatprep.subr.mxu0 0.0
    %69 = vmatpush1.msra.mxu0 0.0
    %70 = vmatprep.subr.mxu0 0.0
    %71 = vmatpush1.msra.mxu0 0.0
    %72 = vmatprep.subr.mxu0 0.0
    %73 = vmatpush1.msra.mxu0 0.0
    %74 = vmatprep.subr.mxu0 0.0
    %75 = vmatpush1.msra.mxu0 0.0
    %76 = vmatprep.subr.mxu0 0.0
    %77 = vmatpush1.msra.mxu0 0.0
    %78 = vmatprep.subr.mxu0 0.0
    %79 = vmatpush1.msra.mxu0 0.0
    %80 = vmatprep.subr.mxu0 0.0
    %81 = vmatpush1.msra.mxu0 0.0
    %82 = vmatprep.subr.mxu0 0.0
    %83 = vmatpush1.msra.mxu0 0.0
    %84 = vmatprep.subr.mxu0 0.0
    %85 = vmatpush1.msra.mxu0 0.0
    %86 = vmatprep.subr.mxu0 0.0
    %87 = vmatpush1.msra.mxu0 0.0
    %88 = vmatprep.subr.mxu0 0.0
    %89 = vmatpush1.msra.mxu0 0.0
    %90 = vmatprep.subr.mxu0 0.0
    %91 = vmatpush1.msra.mxu0 0.0
    %92 = vmatprep.subr.mxu0 0.0
    %93 = vmatpush1.msra.mxu0 0.0
    %94 = vmatprep.subr.mxu0 0.0
    %95 = vmatpush1.msra.mxu0 0.0
    %96 = vmatprep.subr.mxu0 0.0
    %97 = vmatpush1.msra.mxu0 0.0
    %98 = vmatprep.subr.mxu0 0.0
    %99 = vmatpush1.msra.mxu0 0.0
    %100 = vmatprep.mubr.f32.mxu0 0.0
    %v101 = vand.u32 %v27, 4294901760
    %v102 = vsub.f32 %v27, %v101
    %v103 = vand.u32 %v102, 4294901760
    %v104 = vsub.f32 %v102, %v103
    %v105 = vand.u32 %v104, 4294901760
    %106 = vmatmul.mubr.f32.gmra.mrb[0].mxu0 %v105
    %v107 = vpop.f32.mrb[0].mxu0
    %v108 = vadd.f32 %v21, %v107
    %v109 = vpop.f32.mrb[0].mxu0
    %v110 = vadd.f32 %v21, %v109
    %111 = vdwg.mxu0
    %v112 = vand.u32 %v32, 4294901760
    %v113 = vsub.f32 %v32, %v112
    %v114 = vand.u32 %v113, 4294901760
    %v115 = vsub.f32 %v113, %v114
    %v116 = vand.u32 %v115, 4294901760
    %117 = vmatprep.subr.mxu0 %v116
    %v118 = vand.u32 %v30, 4294901760
    %v119 = vsub.f32 %v30, %v118
    %v120 = vand.u32 %v119, 4294901760
    %v121 = vsub.f32 %v119, %v120
    %v122 = vand.u32 %v121, 4294901760
    %123 = vmatpush1.msra.mxu0 %v122
    %124 = vmatprep.subr.mxu0 0.0
    %125 = vmatpush1.msra.mxu0 0.0
    %126 = vmatprep.subr.mxu0 0.0
    %127 = vmatpush1.msra.mxu0 0.0
    %128 = vmatprep.subr.mxu0 0.0
    %129 = vmatpush1.msra.mxu0 0.0
    %130 = vmatprep.subr.mxu0 0.0
    %131 = vmatpush1.msra.mxu0 0.0
    %132 = vmatprep.subr.mxu0 0.0
    %133 = vmatpush1.msra.mxu0 0.0
    %134 = vmatprep.subr.mxu0 0.0
    %135 = vmatpush1.msra.mxu0 0.0
    %136 = vmatprep.subr.mxu0 0.0
    %137 = vmatpush1.msra.mxu0 0.0
    %138 = vmatprep.subr.mxu0 0.0
    %139 = vmatpush1.msra.mxu0 0.0
    %140 = vmatprep.subr.mxu0 0.0
    %141 = vmatpush1.msra.mxu0 0.0
    %142 = vmatprep.subr.mxu0 0.0
    %143 = vmatpush1.msra.mxu0 0.0
    %144 = vmatprep.subr.mxu0 0.0
    %145 = vmatpush1.msra.mxu0 0.0
    %146 = vmatprep.subr.mxu0 0.0
    %147 = vmatpush1.msra.mxu0 0.0
    %148 = vmatprep.subr.mxu0 0.0
    %149 = vmatpush1.msra.mxu0 0.0
    %150 = vmatprep.subr.mxu0 0.0
    %151 = vmatpush1.msra.mxu0 0.0
    %152 = vmatprep.subr.mxu0 0.0
    %153 = vmatpush1.msra.mxu0 0.0
    %154 = vmatprep.subr.mxu0 0.0
    %155 = vmatpush1.msra.mxu0 0.0
    %156 = vmatprep.subr.mxu0 0.0
    %157 = vmatpush1.msra.mxu0 0.0
    %158 = vmatprep.subr.mxu0 0.0
    %159 = vmatpush1.msra.mxu0 0.0
    %160 = vmatprep.subr.mxu0 0.0
    %161 = vmatpush1.msra.mxu0 0.0
    %162 = vmatprep.subr.mxu0 0.0
    %163 = vmatpush1.msra.mxu0 0.0
    %164 = vmatprep.subr.mxu0 0.0
    %165 = vmatpush1.msra.mxu0 0.0
    %166 = vmatprep.subr.mxu0 0.0
    %167 = vmatpush1.msra.mxu0 0.0
    %168 = vmatprep.subr.mxu0 0.0
    %169 = vmatpush1.msra.mxu0 0.0
    %170 = vmatprep.subr.mxu0 0.0
    %171 = vmatpush1.msra.mxu0 0.0
    %172 = vmatprep.subr.mxu0 0.0
    %173 = vmatpush1.msra.mxu0 0.0
    %174 = vmatprep.subr.mxu0 0.0
    %175 = vmatpush1.msra.mxu0 0.0
    %176 = vmatprep.subr.mxu0 0.0
    %177 = vmatpush1.msra.mxu0 0.0
    %178 = vmatprep.subr.mxu0 0.0
    %179 = vmatpush1.msra.mxu0 0.0
    %180 = vmatprep.subr.mxu0 0.0
    %181 = vmatpush1.msra.mxu0 0.0
    %182 = vmatprep.subr.mxu0 0.0
    %183 = vmatpush1.msra.mxu0 0.0
    %184 = vmatprep.subr.mxu0 0.0
    %185 = vmatpush1.msra.mxu0 0.0
    %186 = vmatprep.mubr.f32.mxu0 0.0
    %v187 = vand.u32 %v27, 4294901760
    %188 = vmatmul.mubr.f32.gmra.mrb[0].mxu0 %v187
    %v189 = vpop.f32.mrb[0].mxu0
    %v190 = vadd.f32 %v108, %v189
    %v191 = vpop.f32.mrb[0].mxu0
    %v192 = vadd.f32 %v110, %v191
    %193 = vdwg.mxu0
    %v194 = vand.u32 %v32, 4294901760
    %v195 = vsub.f32 %v32, %v194
    %196 = vmatprep.subr.mxu0 %v195
    %v197 = vand.u32 %v30, 4294901760
    %v198 = vsub.f32 %v30, %v197
    %199 = vmatpush1.msra.mxu0 %v198
    %200 = vmatprep.subr.mxu0 0.0
    %201 = vmatpush1.msra.mxu0 0.0
    %202 = vmatprep.subr.mxu0 0.0
    %203 = vmatpush1.msra.mxu0 0.0
    %204 = vmatprep.subr.mxu0 0.0
    %205 = vmatpush1.msra.mxu0 0.0
    %206 = vmatprep.subr.mxu0 0.0
    %207 = vmatpush1.msra.mxu0 0.0
    %208 = vmatprep.subr.mxu0 0.0
    %209 = vmatpush1.msra.mxu0 0.0
    %210 = vmatprep.subr.mxu0 0.0
    %211 = vmatpush1.msra.mxu0 0.0
    %212 = vmatprep.subr.mxu0 0.0
    %213 = vmatpush1.msra.mxu0 0.0
    %214 = vmatprep.subr.mxu0 0.0
    %215 = vmatpush1.msra.mxu0 0.0
    %216 = vmatprep.subr.mxu0 0.0
    %217 = vmatpush1.msra.mxu0 0.0
    %218 = vmatprep.subr.mxu0 0.0
    %219 = vmatpush1.msra.mxu0 0.0
    %220 = vmatprep.subr.mxu0 0.0
    %221 = vmatpush1.msra.mxu0 0.0
    %222 = vmatprep.subr.mxu0 0.0
    %223 = vmatpush1.msra.mxu0 0.0
    %224 = vmatprep.subr.mxu0 0.0
    %225 = vmatpush1.msra.mxu0 0.0
    %226 = vmatprep.subr.mxu0 0.0
    %227 = vmatpush1.msra.mxu0 0.0
    %228 = vmatprep.subr.mxu0 0.0
    %229 = vmatpush1.msra.mxu0 0.0
    %230 = vmatprep.subr.mxu0 0.0
    %231 = vmatpush1.msra.mxu0 0.0
    %232 = vmatprep.subr.mxu0 0.0
    %233 = vmatpush1.msra.mxu0 0.0
    %234 = vmatprep.subr.mxu0 0.0
    %235 = vmatpush1.msra.mxu0 0.0
    %236 = vmatprep.subr.mxu0 0.0
    %237 = vmatpush1.msra.mxu0 0.0
    %238 = vmatprep.subr.mxu0 0.0
    %239 = vmatpush1.msra.mxu0 0.0
    %240 = vmatprep.subr.mxu0 0.0
    %241 = vmatpush1.msra.mxu0 0.0
    %242 = vmatprep.subr.mxu0 0.0
    %243 = vmatpush1.msra.mxu0 0.0
    %244 = vmatprep.subr.mxu0 0.0
    %245 = vmatpush1.msra.mxu0 0.0
    %246 = vmatprep.subr.mxu0 0.0
    %247 = vmatpush1.msra.mxu0 0.0
    %248 = vmatprep.subr.mxu0 0.0
    %249 = vmatpush1.msra.mxu0 0.0
    %250 = vmatprep.subr.mxu0 0.0
    %251 = vmatpush1.msra.mxu0 0.0
    %252 = vmatprep.subr.mxu0 0.0
    %253 = vmatpush1.msra.mxu0 0.0
    %254 = vmatprep.subr.mxu0 0.0
    %255 = vmatpush1.msra.mxu0 0.0
    %256 = vmatprep.subr.mxu0 0.0
    %257 = vmatpush1.msra.mxu0 0.0
    %258 = vmatprep.subr.mxu0 0.0
    %259 = vmatpush1.msra.mxu0 0.0
    %260 = vmatprep.subr.mxu0 0.0
    %261 = vmatpush1.msra.mxu0 0.0
    %262 = vmatprep.mubr.f32.mxu0 0.0
    %v263 = vand.u32 %v27, 4294901760
    %v264 = vsub.f32 %v27, %v263
    %265 = vmatmul.mubr.f32.gmra.mrb[0].mxu0 %v264
    %v266 = vpop.f32.mrb[0].mxu0
    %v267 = vadd.f32 %v190, %v266
    %v268 = vpop.f32.mrb[0].mxu0
    %v269 = vadd.f32 %v192, %v268
    %270 = vdwg.mxu0
    %v271 = vand.u32 %v32, 4294901760
    %272 = vmatprep.subr.mxu0 %v271
    %v273 = vand.u32 %v30, 4294901760
    %274 = vmatpush1.msra.mxu0 %v273
    %275 = vmatprep.subr.mxu0 0.0
    %276 = vmatpush1.msra.mxu0 0.0
    %277 = vmatprep.subr.mxu0 0.0
    %278 = vmatpush1.msra.mxu0 0.0
    %279 = vmatprep.subr.mxu0 0.0
    %280 = vmatpush1.msra.mxu0 0.0
    %281 = vmatprep.subr.mxu0 0.0
    %282 = vmatpush1.msra.mxu0 0.0
    %283 = vmatprep.subr.mxu0 0.0
    %284 = vmatpush1.msra.mxu0 0.0
    %285 = vmatprep.subr.mxu0 0.0
    %286 = vmatpush1.msra.mxu0 0.0
    %287 = vmatprep.subr.mxu0 0.0
    %288 = vmatpush1.msra.mxu0 0.0
    %289 = vmatprep.subr.mxu0 0.0
    %290 = vmatpush1.msra.mxu0 0.0
    %291 = vmatprep.subr.mxu0 0.0
    %292 = vmatpush1.msra.mxu0 0.0
    %293 = vmatprep.subr.mxu0 0.0
    %294 = vmatpush1.msra.mxu0 0.0
    %295 = vmatprep.subr.mxu0 0.0
    %296 = vmatpush1.msra.mxu0 0.0
    %297 = vmatprep.subr.mxu0 0.0
    %298 = vmatpush1.msra.mxu0 0.0
    %299 = vmatprep.subr.mxu0 0.0
    %300 = vmatpush1.msra.mxu0 0.0
    %301 = vmatprep.subr.mxu0 0.0
    %302 = vmatpush1.msra.mxu0 0.0
    %303 = vmatprep.subr.mxu0 0.0
    %304 = vmatpush1.msra.mxu0 0.0
    %305 = vmatprep.subr.mxu0 0.0
    %306 = vmatpush1.msra.mxu0 0.0
    %307 = vmatprep.subr.mxu0 0.0
    %308 = vmatpush1.msra.mxu0 0.0
    %309 = vmatprep.subr.mxu0 0.0
    %310 = vmatpush1.msra.mxu0 0.0
    %311 = vmatprep.subr.mxu0 0.0
    %312 = vmatpush1.msra.mxu0 0.0
    %313 = vmatprep.subr.mxu0 0.0
    %314 = vmatpush1.msra.mxu0 0.0
    %315 = vmatprep.subr.mxu0 0.0
    %316 = vmatpush1.msra.mxu0 0.0
    %317 = vmatprep.subr.mxu0 0.0
    %318 = vmatpush1.msra.mxu0 0.0
    %319 = vmatprep.subr.mxu0 0.0
    %320 = vmatpush1.msra.mxu0 0.0
    %321 = vmatprep.subr.mxu0 0.0
    %322 = vmatpush1.msra.mxu0 0.0
    %323 = vmatprep.subr.mxu0 0.0
    %324 = vmatpush1.msra.mxu0 0.0
    %325 = vmatprep.subr.mxu0 0.0
    %326 = vmatpush1.msra.mxu0 0.0
    %327 = vmatprep.subr.mxu0 0.0
    %328 = vmatpush1.msra.mxu0 0.0
    %329 = vmatprep.subr.mxu0 0.0
    %330 = vmatpush1.msra.mxu0 0.0
    %331 = vmatprep.subr.mxu0 0.0
    %332 = vmatpush1.msra.mxu0 0.0
    %333 = vmatprep.subr.mxu0 0.0
    %334 = vmatpush1.msra.mxu0 0.0
    %335 = vmatprep.subr.mxu0 0.0
    %336 = vmatpush1.msra.mxu0 0.0
    %337 = vmatprep.mubr.f32.mxu0 0.0
    %v338 = vand.u32 %v27, 4294901760
    %v339 = vsub.f32 %v27, %v338
    %v340 = vand.u32 %v339, 4294901760
    %341 = vmatmul.mubr.f32.gmra.mrb[0].mxu0 %v340
    %v342 = vpop.f32.mrb[0].mxu0
    %v343 = vadd.f32 %v267, %v342
    %v344 = vpop.f32.mrb[0].mxu0
    %v345 = vadd.f32 %v269, %v344
    %346 = vdwg.mxu0
    %v347 = vand.u32 %v32, 4294901760
    %v348 = vsub.f32 %v32, %v347
    %v349 = vand.u32 %v348, 4294901760
    %350 = vmatprep.subr.mxu0 %v349
    %v351 = vand.u32 %v30, 4294901760
    %v352 = vsub.f32 %v30, %v351
    %v353 = vand.u32 %v352, 4294901760
    %354 = vmatpush1.msra.mxu0 %v353
    %355 = vmatprep.subr.mxu0 0.0
    %356 = vmatpush1.msra.mxu0 0.0
    %357 = vmatprep.subr.mxu0 0.0
    %358 = vmatpush1.msra.mxu0 0.0
    %359 = vmatprep.subr.mxu0 0.0
    %360 = vmatpush1.msra.mxu0 0.0
    %361 = vmatprep.subr.mxu0 0.0
    %362 = vmatpush1.msra.mxu0 0.0
    %363 = vmatprep.subr.mxu0 0.0
    %364 = vmatpush1.msra.mxu0 0.0
    %365 = vmatprep.subr.mxu0 0.0
    %366 = vmatpush1.msra.mxu0 0.0
    %367 = vmatprep.subr.mxu0 0.0
    %368 = vmatpush1.msra.mxu0 0.0
    %369 = vmatprep.subr.mxu0 0.0
    %370 = vmatpush1.msra.mxu0 0.0
    %371 = vmatprep.subr.mxu0 0.0
    %372 = vmatpush1.msra.mxu0 0.0
    %373 = vmatprep.subr.mxu0 0.0
    %374 = vmatpush1.msra.mxu0 0.0
    %375 = vmatprep.subr.mxu0 0.0
    %376 = vmatpush1.msra.mxu0 0.0
    %377 = vmatprep.subr.mxu0 0.0
    %378 = vmatpush1.msra.mxu0 0.0
    %379 = vmatprep.subr.mxu0 0.0
    %380 = vmatpush1.msra.mxu0 0.0
    %381 = vmatprep.subr.mxu0 0.0
    %382 = vmatpush1.msra.mxu0 0.0
    %383 = vmatprep.subr.mxu0 0.0
    %384 = vmatpush1.msra.mxu0 0.0
    %385 = vmatprep.subr.mxu0 0.0
    %386 = vmatpush1.msra.mxu0 0.0
    %387 = vmatprep.subr.mxu0 0.0
    %388 = vmatpush1.msra.mxu0 0.0
    %389 = vmatprep.subr.mxu0 0.0
    %390 = vmatpush1.msra.mxu0 0.0
    %391 = vmatprep.subr.mxu0 0.0
    %392 = vmatpush1.msra.mxu0 0.0
    %393 = vmatprep.subr.mxu0 0.0
    %394 = vmatpush1.msra.mxu0 0.0
    %395 = vmatprep.subr.mxu0 0.0
    %396 = vmatpush1.msra.mxu0 0.0
    %397 = vmatprep.subr.mxu0 0.0
    %398 = vmatpush1.msra.mxu0 0.0
    %399 = vmatprep.subr.mxu0 0.0
    %400 = vmatpush1.msra.mxu0 0.0
    %401 = vmatprep.subr.mxu0 0.0
    %402 = vmatpush1.msra.mxu0 0.0
    %403 = vmatprep.subr.mxu0 0.0
    %404 = vmatpush1.msra.mxu0 0.0
    %405 = vmatprep.subr.mxu0 0.0
    %406 = vmatpush1.msra.mxu0 0.0
    %407 = vmatprep.subr.mxu0 0.0
    %408 = vmatpush1.msra.mxu0 0.0
    %409 = vmatprep.subr.mxu0 0.0
    %410 = vmatpush1.msra.mxu0 0.0
    %411 = vmatprep.subr.mxu0 0.0
    %412 = vmatpush1.msra.mxu0 0.0
    %413 = vmatprep.subr.mxu0 0.0
    %414 = vmatpush1.msra.mxu0 0.0
    %415 = vmatprep.subr.mxu0 0.0
    %416 = vmatpush1.msra.mxu0 0.0
    %417 = vmatprep.mubr.f32.mxu0 0.0
    %v418 = vand.u32 %v27, 4294901760
    %419 = vmatmul.mubr.f32.gmra.mrb[0].mxu0 %v418
    %v420 = vpop.f32.mrb[0].mxu0
    %v421 = vadd.f32 %v343, %v420
    %v422 = vpop.f32.mrb[0].mxu0
    %v423 = vadd.f32 %v345, %v422
    %424 = vdwg.mxu0
    %v425 = vand.u32 %v32, 4294901760
    %426 = vmatprep.subr.mxu0 %v425
    %v427 = vand.u32 %v30, 4294901760
    %428 = vmatpush1.msra.mxu0 %v427
    %429 = vmatprep.subr.mxu0 0.0
    %430 = vmatpush1.msra.mxu0 0.0
    %431 = vmatprep.subr.mxu0 0.0
    %432 = vmatpush1.msra.mxu0 0.0
    %433 = vmatprep.subr.mxu0 0.0
    %434 = vmatpush1.msra.mxu0 0.0
    %435 = vmatprep.subr.mxu0 0.0
    %436 = vmatpush1.msra.mxu0 0.0
    %437 = vmatprep.subr.mxu0 0.0
    %438 = vmatpush1.msra.mxu0 0.0
    %439 = vmatprep.subr.mxu0 0.0
    %440 = vmatpush1.msra.mxu0 0.0
    %441 = vmatprep.subr.mxu0 0.0
    %442 = vmatpush1.msra.mxu0 0.0
    %443 = vmatprep.subr.mxu0 0.0
    %444 = vmatpush1.msra.mxu0 0.0
    %445 = vmatprep.subr.mxu0 0.0
    %446 = vmatpush1.msra.mxu0 0.0
    %447 = vmatprep.subr.mxu0 0.0
    %448 = vmatpush1.msra.mxu0 0.0
    %449 = vmatprep.subr.mxu0 0.0
    %450 = vmatpush1.msra.mxu0 0.0
    %451 = vmatprep.subr.mxu0 0.0
    %452 = vmatpush1.msra.mxu0 0.0
    %453 = vmatprep.subr.mxu0 0.0
    %454 = vmatpush1.msra.mxu0 0.0
    %455 = vmatprep.subr.mxu0 0.0
    %456 = vmatpush1.msra.mxu0 0.0
    %457 = vmatprep.subr.mxu0 0.0
    %458 = vmatpush1.msra.mxu0 0.0
    %459 = vmatprep.subr.mxu0 0.0
    %460 = vmatpush1.msra.mxu0 0.0
    %461 = vmatprep.subr.mxu0 0.0
    %462 = vmatpush1.msra.mxu0 0.0
    %463 = vmatprep.subr.mxu0 0.0
    %464 = vmatpush1.msra.mxu0 0.0
    %465 = vmatprep.subr.mxu0 0.0
    %466 = vmatpush1.msra.mxu0 0.0
    %467 = vmatprep.subr.mxu0 0.0
    %468 = vmatpush1.msra.mxu0 0.0
    %469 = vmatprep.subr.mxu0 0.0
    %470 = vmatpush1.msra.mxu0 0.0
    %471 = vmatprep.subr.mxu0 0.0
    %472 = vmatpush1.msra.mxu0 0.0
    %473 = vmatprep.subr.mxu0 0.0
    %474 = vmatpush1.msra.mxu0 0.0
    %475 = vmatprep.subr.mxu0 0.0
    %476 = vmatpush1.msra.mxu0 0.0
    %477 = vmatprep.subr.mxu0 0.0
    %478 = vmatpush1.msra.mxu0 0.0
    %479 = vmatprep.subr.mxu0 0.0
    %480 = vmatpush1.msra.mxu0 0.0
    %481 = vmatprep.subr.mxu0 0.0
    %482 = vmatpush1.msra.mxu0 0.0
    %483 = vmatprep.subr.mxu0 0.0
    %484 = vmatpush1.msra.mxu0 0.0
    %485 = vmatprep.subr.mxu0 0.0
    %486 = vmatpush1.msra.mxu0 0.0
    %487 = vmatprep.subr.mxu0 0.0
    %488 = vmatpush1.msra.mxu0 0.0
    %489 = vmatprep.subr.mxu0 0.0
    %490 = vmatpush1.msra.mxu0 0.0
    %491 = vmatprep.mubr.f32.mxu0 0.0
    %v492 = vand.u32 %v27, 4294901760
    %493 = vmatmul.mubr.f32.gmra.mrb[0].mxu0 %v492
    %v494 = vpop.f32.mrb[0].mxu0
    %v495 = vadd.f32 %v421, %v494
    %v496 = vpop.f32.mrb[0].mxu0
    %v497 = vadd.f32 %v423, %v496
    %498 = vdwg.mxu0
    %499 = vst [vmem:[#allocation2] sm:$0xff] %v495
    %500 = vst [vmem:[#allocation2 + $0x8] sm:$0xff] %v497
    %s501 = scalar_lea.vmem %s0, 8
    %v502 = vld [vmem:[%s501] sm:$0xff]
    %v504 = vcombine.high %v502, %v502
    %v505 = vsel %vm29, %v502, 0
    %v507 = vsel %vm29, %v504, 0
    %v509 = vand.u32 %v507, 4294901760
    %510 = vmatprep.subr.mxu0 %v509
    %v511 = vand.u32 %v505, 4294901760
    %512 = vmatpush1.msra.mxu0 %v511
    %513 = vmatprep.subr.mxu0 0.0
    %514 = vmatpush1.msra.mxu0 0.0
    %515 = vmatprep.subr.mxu0 0.0
    %516 = vmatpush1.msra.mxu0 0.0
    %517 = vmatprep.subr.mxu0 0.0
    %518 = vmatpush1.msra.mxu0 0.0
    %519 = vmatprep.subr.mxu0 0.0
    %520 = vmatpush1.msra.mxu0 0.0
    %521 = vmatprep.subr.mxu0 0.0
    %522 = vmatpush1.msra.mxu0 0.0
    %523 = vmatprep.subr.mxu0 0.0
    %524 = vmatpush1.msra.mxu0 0.0
    %525 = vmatprep.subr.mxu0 0.0
    %526 = vmatpush1.msra.mxu0 0.0
    %527 = vmatprep.subr.mxu0 0.0
    %528 = vmatpush1.msra.mxu0 0.0
    %529 = vmatprep.subr.mxu0 0.0
    %530 = vmatpush1.msra.mxu0 0.0
    %531 = vmatprep.subr.mxu0 0.0
    %532 = vmatpush1.msra.mxu0 0.0
    %533 = vmatprep.subr.mxu0 0.0
    %534 = vmatpush1.msra.mxu0 0.0
    %535 = vmatprep.subr.mxu0 0.0
    %536 = vmatpush1.msra.mxu0 0.0
    %537 = vmatprep.subr.mxu0 0.0
    %538 = vmatpush1.msra.mxu0 0.0
    %539 = vmatprep.subr.mxu0 0.0
    %540 = vmatpush1.msra.mxu0 0.0
    %541 = vmatprep.subr.mxu0 0.0
    %542 = vmatpush1.msra.mxu0 0.0
    %543 = vmatprep.subr.mxu0 0.0
    %544 = vmatpush1.msra.mxu0 0.0
    %545 = vmatprep.subr.mxu0 0.0
    %546 = vmatpush1.msra.mxu0 0.0
    %547 = vmatprep.subr.mxu0 0.0
    %548 = vmatpush1.msra.mxu0 0.0
    %549 = vmatprep.subr.mxu0 0.0
    %550 = vmatpush1.msra.mxu0 0.0
    %551 = vmatprep.subr.mxu0 0.0
    %552 = vmatpush1.msra.mxu0 0.0
    %553 = vmatprep.subr.mxu0 0.0
    %554 = vmatpush1.msra.mxu0 0.0
    %555 = vmatprep.subr.mxu0 0.0
    %556 = vmatpush1.msra.mxu0 0.0
    %557 = vmatprep.subr.mxu0 0.0
    %558 = vmatpush1.msra.mxu0 0.0
    %559 = vmatprep.subr.mxu0 0.0
    %560 = vmatpush1.msra.mxu0 0.0
    %561 = vmatprep.subr.mxu0 0.0
    %562 = vmatpush1.msra.mxu0 0.0
    %563 = vmatprep.subr.mxu0 0.0
    %564 = vmatpush1.msra.mxu0 0.0
    %565 = vmatprep.subr.mxu0 0.0
    %566 = vmatpush1.msra.mxu0 0.0
    %567 = vmatprep.subr.mxu0 0.0
    %568 = vmatpush1.msra.mxu0 0.0
    %569 = vmatprep.subr.mxu0 0.0
    %570 = vmatpush1.msra.mxu0 0.0
    %571 = vmatprep.subr.mxu0 0.0
    %572 = vmatpush1.msra.mxu0 0.0
    %573 = vmatprep.subr.mxu0 0.0
    %574 = vmatpush1.msra.mxu0 0.0
    %575 = vmatprep.mubr.f32.mxu0 0.0
    %v576 = vand.u32 %v27, 4294901760
    %v577 = vsub.f32 %v27, %v576
    %v578 = vand.u32 %v577, 4294901760
    %v579 = vsub.f32 %v577, %v578
    %v580 = vand.u32 %v579, 4294901760
    %581 = vmatmul.mubr.f32.gmra.mrb[0].mxu0 %v580
    %v582 = vpop.f32.mrb[0].mxu0
    %v583 = vadd.f32 %v21, %v582
    %v584 = vpop.f32.mrb[0].mxu0
    %v585 = vadd.f32 %v21, %v584
    %586 = vdwg.mxu0
    %v587 = vand.u32 %v507, 4294901760
    %v588 = vsub.f32 %v507, %v587
    %v589 = vand.u32 %v588, 4294901760
    %v590 = vsub.f32 %v588, %v589
    %v591 = vand.u32 %v590, 4294901760
    %592 = vmatprep.subr.mxu0 %v591
    %v593 = vand.u32 %v505, 4294901760
    %v594 = vsub.f32 %v505, %v593
    %v595 = vand.u32 %v594, 4294901760
    %v596 = vsub.f32 %v594, %v595
    %v597 = vand.u32 %v596, 4294901760
    %598 = vmatpush1.msra.mxu0 %v597
    %599 = vmatprep.subr.mxu0 0.0
    %600 = vmatpush1.msra.mxu0 0.0
    %601 = vmatprep.subr.mxu0 0.0
    %602 = vmatpush1.msra.mxu0 0.0
    %603 = vmatprep.subr.mxu0 0.0
    %604 = vmatpush1.msra.mxu0 0.0
    %605 = vmatprep.subr.mxu0 0.0
    %606 = vmatpush1.msra.mxu0 0.0
    %607 = vmatprep.subr.mxu0 0.0
    %608 = vmatpush1.msra.mxu0 0.0
    %609 = vmatprep.subr.mxu0 0.0
    %610 = vmatpush1.msra.mxu0 0.0
    %611 = vmatprep.subr.mxu0 0.0
    %612 = vmatpush1.msra.mxu0 0.0
    %613 = vmatprep.subr.mxu0 0.0
    %614 = vmatpush1.msra.mxu0 0.0
    %615 = vmatprep.subr.mxu0 0.0
    %616 = vmatpush1.msra.mxu0 0.0
    %617 = vmatprep.subr.mxu0 0.0
    %618 = vmatpush1.msra.mxu0 0.0
    %619 = vmatprep.subr.mxu0 0.0
    %620 = vmatpush1.msra.mxu0 0.0
    %621 = vmatprep.subr.mxu0 0.0
    %622 = vmatpush1.msra.mxu0 0.0
    %623 = vmatprep.subr.mxu0 0.0
    %624 = vmatpush1.msra.mxu0 0.0
    %625 = vmatprep.subr.mxu0 0.0
    %626 = vmatpush1.msra.mxu0 0.0
    %627 = vmatprep.subr.mxu0 0.0
    %628 = vmatpush1.msra.mxu0 0.0
    %629 = vmatprep.subr.mxu0 0.0
    %630 = vmatpush1.msra.mxu0 0.0
    %631 = vmatprep.subr.mxu0 0.0
    %632 = vmatpush1.msra.mxu0 0.0
    %633 = vmatprep.subr.mxu0 0.0
    %634 = vmatpush1.msra.mxu0 0.0
    %635 = vmatprep.subr.mxu0 0.0
    %636 = vmatpush1.msra.mxu0 0.0
    %637 = vmatprep.subr.mxu0 0.0
    %638 = vmatpush1.msra.mxu0 0.0
    %639 = vmatprep.subr.mxu0 0.0
    %640 = vmatpush1.msra.mxu0 0.0
    %641 = vmatprep.subr.mxu0 0.0
    %642 = vmatpush1.msra.mxu0 0.0
    %643 = vmatprep.subr.mxu0 0.0
    %644 = vmatpush1.msra.mxu0 0.0
    %645 = vmatprep.subr.mxu0 0.0
    %646 = vmatpush1.msra.mxu0 0.0
    %647 = vmatprep.subr.mxu0 0.0
    %648 = vmatpush1.msra.mxu0 0.0
    %649 = vmatprep.subr.mxu0 0.0
    %650 = vmatpush1.msra.mxu0 0.0
    %651 = vmatprep.subr.mxu0 0.0
    %652 = vmatpush1.msra.mxu0 0.0
    %653 = vmatprep.subr.mxu0 0.0
    %654 = vmatpush1.msra.mxu0 0.0
    %655 = vmatprep.subr.mxu0 0.0
    %656 = vmatpush1.msra.mxu0 0.0
    %657 = vmatprep.subr.mxu0 0.0
    %658 = vmatpush1.msra.mxu0 0.0
    %659 = vmatprep.subr.mxu0 0.0
    %660 = vmatpush1.msra.mxu0 0.0
    %661 = vmatprep.mubr.f32.mxu0 0.0
    %v662 = vand.u32 %v27, 4294901760
    %663 = vmatmul.mubr.f32.gmra.mrb[0].mxu0 %v662
    %v664 = vpop.f32.mrb[0].mxu0
    %v665 = vadd.f32 %v583, %v664
    %v666 = vpop.f32.mrb[0].mxu0
    %v667 = vadd.f32 %v585, %v666
    %668 = vdwg.mxu0
    %v669 = vand.u32 %v507, 4294901760
    %v670 = vsub.f32 %v507, %v669
    %671 = vmatprep.subr.mxu0 %v670
    %v672 = vand.u32 %v505, 4294901760
    %v673 = vsub.f32 %v505, %v672
    %674 = vmatpush1.msra.mxu0 %v673
    %675 = vmatprep.subr.mxu0 0.0
    %676 = vmatpush1.msra.mxu0 0.0
    %677 = vmatprep.subr.mxu0 0.0
    %678 = vmatpush1.msra.mxu0 0.0
    %679 = vmatprep.subr.mxu0 0.0
    %680 = vmatpush1.msra.mxu0 0.0
    %681 = vmatprep.subr.mxu0 0.0
    %682 = vmatpush1.msra.mxu0 0.0
    %683 = vmatprep.subr.mxu0 0.0
    %684 = vmatpush1.msra.mxu0 0.0
    %685 = vmatprep.subr.mxu0 0.0
    %686 = vmatpush1.msra.mxu0 0.0
    %687 = vmatprep.subr.mxu0 0.0
    %688 = vmatpush1.msra.mxu0 0.0
    %689 = vmatprep.subr.mxu0 0.0
    %690 = vmatpush1.msra.mxu0 0.0
    %691 = vmatprep.subr.mxu0 0.0
    %692 = vmatpush1.msra.mxu0 0.0
    %693 = vmatprep.subr.mxu0 0.0
    %694 = vmatpush1.msra.mxu0 0.0
    %695 = vmatprep.subr.mxu0 0.0
    %696 = vmatpush1.msra.mxu0 0.0
    %697 = vmatprep.subr.mxu0 0.0
    %698 = vmatpush1.msra.mxu0 0.0
    %699 = vmatprep.subr.mxu0 0.0
    %700 = vmatpush1.msra.mxu0 0.0
    %701 = vmatprep.subr.mxu0 0.0
    %702 = vmatpush1.msra.mxu0 0.0
    %703 = vmatprep.subr.mxu0 0.0
    %704 = vmatpush1.msra.mxu0 0.0
    %705 = vmatprep.subr.mxu0 0.0
    %706 = vmatpush1.msra.mxu0 0.0
    %707 = vmatprep.subr.mxu0 0.0
    %708 = vmatpush1.msra.mxu0 0.0
    %709 = vmatprep.subr.mxu0 0.0
    %710 = vmatpush1.msra.mxu0 0.0
    %711 = vmatprep.subr.mxu0 0.0
    %712 = vmatpush1.msra.mxu0 0.0
    %713 = vmatprep.subr.mxu0 0.0
    %714 = vmatpush1.msra.mxu0 0.0
    %715 = vmatprep.subr.mxu0 0.0
    %716 = vmatpush1.msra.mxu0 0.0
    %717 = vmatprep.subr.mxu0 0.0
    %718 = vmatpush1.msra.mxu0 0.0
    %719 = vmatprep.subr.mxu0 0.0
    %720 = vmatpush1.msra.mxu0 0.0
    %721 = vmatprep.subr.mxu0 0.0
    %722 = vmatpush1.msra.mxu0 0.0
    %723 = vmatprep.subr.mxu0 0.0
    %724 = vmatpush1.msra.mxu0 0.0
    %725 = vmatprep.subr.mxu0 0.0
    %726 = vmatpush1.msra.mxu0 0.0
    %727 = vmatprep.subr.mxu0 0.0
    %728 = vmatpush1.msra.mxu0 0.0
    %729 = vmatprep.subr.mxu0 0.0
    %730 = vmatpush1.msra.mxu0 0.0
    %731 = vmatprep.subr.mxu0 0.0
    %732 = vmatpush1.msra.mxu0 0.0
    %733 = vmatprep.subr.mxu0 0.0
    %734 = vmatpush1.msra.mxu0 0.0
    %735 = vmatprep.subr.mxu0 0.0
    %736 = vmatpush1.msra.mxu0 0.0
    %737 = vmatprep.mubr.f32.mxu0 0.0
    %v738 = vand.u32 %v27, 4294901760
    %v739 = vsub.f32 %v27, %v738
    %740 = vmatmul.mubr.f32.gmra.mrb[0].mxu0 %v739
    %v741 = vpop.f32.mrb[0].mxu0
    %v742 = vadd.f32 %v665, %v741
    %v743 = vpop.f32.mrb[0].mxu0
    %v744 = vadd.f32 %v667, %v743
    %745 = vdwg.mxu0
    %v746 = vand.u32 %v507, 4294901760
    %747 = vmatprep.subr.mxu0 %v746
    %v748 = vand.u32 %v505, 4294901760
    %749 = vmatpush1.msra.mxu0 %v748
    %750 = vmatprep.subr.mxu0 0.0
    %751 = vmatpush1.msra.mxu0 0.0
    %752 = vmatprep.subr.mxu0 0.0
    %753 = vmatpush1.msra.mxu0 0.0
    %754 = vmatprep.subr.mxu0 0.0
    %755 = vmatpush1.msra.mxu0 0.0
    %756 = vmatprep.subr.mxu0 0.0
    %757 = vmatpush1.msra.mxu0 0.0
    %758 = vmatprep.subr.mxu0 0.0
    %759 = vmatpush1.msra.mxu0 0.0
    %760 = vmatprep.subr.mxu0 0.0
    %761 = vmatpush1.msra.mxu0 0.0
    %762 = vmatprep.subr.mxu0 0.0
    %763 = vmatpush1.msra.mxu0 0.0
    %764 = vmatprep.subr.mxu0 0.0
    %765 = vmatpush1.msra.mxu0 0.0
    %766 = vmatprep.subr.mxu0 0.0
    %767 = vmatpush1.msra.mxu0 0.0
    %768 = vmatprep.subr.mxu0 0.0
    %769 = vmatpush1.msra.mxu0 0.0
    %770 = vmatprep.subr.mxu0 0.0
    %771 = vmatpush1.msra.mxu0 0.0
    %772 = vmatprep.subr.mxu0 0.0
    %773 = vmatpush1.msra.mxu0 0.0
    %774 = vmatprep.subr.mxu0 0.0
    %775 = vmatpush1.msra.mxu0 0.0
    %776 = vmatprep.subr.mxu0 0.0
    %777 = vmatpush1.msra.mxu0 0.0
    %778 = vmatprep.subr.mxu0 0.0
    %779 = vmatpush1.msra.mxu0 0.0
    %780 = vmatprep.subr.mxu0 0.0
    %781 = vmatpush1.msra.mxu0 0.0
    %782 = vmatprep.subr.mxu0 0.0
    %783 = vmatpush1.msra.mxu0 0.0
    %784 = vmatprep.subr.mxu0 0.0
    %785 = vmatpush1.msra.mxu0 0.0
    %786 = vmatprep.subr.mxu0 0.0
    %787 = vmatpush1.msra.mxu0 0.0
    %788 = vmatprep.subr.mxu0 0.0
    %789 = vmatpush1.msra.mxu0 0.0
    %790 = vmatprep.subr.mxu0 0.0
    %791 = vmatpush1.msra.mxu0 0.0
    %792 = vmatprep.subr.mxu0 0.0
    %793 = vmatpush1.msra.mxu0 0.0
    %794 = vmatprep.subr.mxu0 0.0
    %795 = vmatpush1.msra.mxu0 0.0
    %796 = vmatprep.subr.mxu0 0.0
    %797 = vmatpush1.msra.mxu0 0.0
    %798 = vmatprep.subr.mxu0 0.0
    %799 = vmatpush1.msra.mxu0 0.0
    %800 = vmatprep.subr.mxu0 0.0
    %801 = vmatpush1.msra.mxu0 0.0
    %802 = vmatprep.subr.mxu0 0.0
    %803 = vmatpush1.msra.mxu0 0.0
    %804 = vmatprep.subr.mxu0 0.0
    %805 = vmatpush1.msra.mxu0 0.0
    %806 = vmatprep.subr.mxu0 0.0
    %807 = vmatpush1.msra.mxu0 0.0
    %808 = vmatprep.subr.mxu0 0.0
    %809 = vmatpush1.msra.mxu0 0.0
    %810 = vmatprep.subr.mxu0 0.0
    %811 = vmatpush1.msra.mxu0 0.0
    %812 = vmatprep.mubr.f32.mxu0 0.0
    %v813 = vand.u32 %v27, 4294901760
    %v814 = vsub.f32 %v27, %v813
    %v815 = vand.u32 %v814, 4294901760
    %816 = vmatmul.mubr.f32.gmra.mrb[0].mxu0 %v815
    %v817 = vpop.f32.mrb[0].mxu0
    %v818 = vadd.f32 %v742, %v817
    %v819 = vpop.f32.mrb[0].mxu0
    %v820 = vadd.f32 %v744, %v819
    %821 = vdwg.mxu0
    %v822 = vand.u32 %v507, 4294901760
    %v823 = vsub.f32 %v507, %v822
    %v824 = vand.u32 %v823, 4294901760
    %825 = vmatprep.subr.mxu0 %v824
    %v826 = vand.u32 %v505, 4294901760
    %v827 = vsub.f32 %v505, %v826
    %v828 = vand.u32 %v827, 4294901760
    %829 = vmatpush1.msra.mxu0 %v828
    %830 = vmatprep.subr.mxu0 0.0
    %831 = vmatpush1.msra.mxu0 0.0
    %832 = vmatprep.subr.mxu0 0.0
    %833 = vmatpush1.msra.mxu0 0.0
    %834 = vmatprep.subr.mxu0 0.0
    %835 = vmatpush1.msra.mxu0 0.0
    %836 = vmatprep.subr.mxu0 0.0
    %837 = vmatpush1.msra.mxu0 0.0
    %838 = vmatprep.subr.mxu0 0.0
    %839 = vmatpush1.msra.mxu0 0.0
    %840 = vmatprep.subr.mxu0 0.0
    %841 = vmatpush1.msra.mxu0 0.0
    %842 = vmatprep.subr.mxu0 0.0
    %843 = vmatpush1.msra.mxu0 0.0
    %844 = vmatprep.subr.mxu0 0.0
    %845 = vmatpush1.msra.mxu0 0.0
    %846 = vmatprep.subr.mxu0 0.0
    %847 = vmatpush1.msra.mxu0 0.0
    %848 = vmatprep.subr.mxu0 0.0
    %849 = vmatpush1.msra.mxu0 0.0
    %850 = vmatprep.subr.mxu0 0.0
    %851 = vmatpush1.msra.mxu0 0.0
    %852 = vmatprep.subr.mxu0 0.0
    %853 = vmatpush1.msra.mxu0 0.0
    %854 = vmatprep.subr.mxu0 0.0
    %855 = vmatpush1.msra.mxu0 0.0
    %856 = vmatprep.subr.mxu0 0.0
    %857 = vmatpush1.msra.mxu0 0.0
    %858 = vmatprep.subr.mxu0 0.0
    %859 = vmatpush1.msra.mxu0 0.0
    %860 = vmatprep.subr.mxu0 0.0
    %861 = vmatpush1.msra.mxu0 0.0
    %862 = vmatprep.subr.mxu0 0.0
    %863 = vmatpush1.msra.mxu0 0.0
    %864 = vmatprep.subr.mxu0 0.0
    %865 = vmatpush1.msra.mxu0 0.0
    %866 = vmatprep.subr.mxu0 0.0
    %867 = vmatpush1.msra.mxu0 0.0
    %868 = vmatprep.subr.mxu0 0.0
    %869 = vmatpush1.msra.mxu0 0.0
    %870 = vmatprep.subr.mxu0 0.0
    %871 = vmatpush1.msra.mxu0 0.0
    %872 = vmatprep.subr.mxu0 0.0
    %873 = vmatpush1.msra.mxu0 0.0
    %874 = vmatprep.subr.mxu0 0.0
    %875 = vmatpush1.msra.mxu0 0.0
    %876 = vmatprep.subr.mxu0 0.0
    %877 = vmatpush1.msra.mxu0 0.0
    %878 = vmatprep.subr.mxu0 0.0
    %879 = vmatpush1.msra.mxu0 0.0
    %880 = vmatprep.subr.mxu0 0.0
    %881 = vmatpush1.msra.mxu0 0.0
    %882 = vmatprep.subr.mxu0 0.0
    %883 = vmatpush1.msra.mxu0 0.0
    %884 = vmatprep.subr.mxu0 0.0
    %885 = vmatpush1.msra.mxu0 0.0
    %886 = vmatprep.subr.mxu0 0.0
    %887 = vmatpush1.msra.mxu0 0.0
    %888 = vmatprep.subr.mxu0 0.0
    %889 = vmatpush1.msra.mxu0 0.0
    %890 = vmatprep.subr.mxu0 0.0
    %891 = vmatpush1.msra.mxu0 0.0
    %892 = vmatprep.mubr.f32.mxu0 0.0
    %v893 = vand.u32 %v27, 4294901760
    %894 = vmatmul.mubr.f32.gmra.mrb[0].mxu0 %v893
    %v895 = vpop.f32.mrb[0].mxu0
    %v896 = vadd.f32 %v818, %v895
    %v897 = vpop.f32.mrb[0].mxu0
    %v898 = vadd.f32 %v820, %v897
    %899 = vdwg.mxu0
    %v900 = vand.u32 %v507, 4294901760
    %901 = vmatprep.subr.mxu0 %v900
    %v902 = vand.u32 %v505, 4294901760
    %903 = vmatpush1.msra.mxu0 %v902
    %904 = vmatprep.subr.mxu0 0.0
    %905 = vmatpush1.msra.mxu0 0.0
    %906 = vmatprep.subr.mxu0 0.0
    %907 = vmatpush1.msra.mxu0 0.0
    %908 = vmatprep.subr.mxu0 0.0
    %909 = vmatpush1.msra.mxu0 0.0
    %910 = vmatprep.subr.mxu0 0.0
    %911 = vmatpush1.msra.mxu0 0.0
    %912 = vmatprep.subr.mxu0 0.0
    %913 = vmatpush1.msra.mxu0 0.0
    %914 = vmatprep.subr.mxu0 0.0
    %915 = vmatpush1.msra.mxu0 0.0
    %916 = vmatprep.subr.mxu0 0.0
    %917 = vmatpush1.msra.mxu0 0.0
    %918 = vmatprep.subr.mxu0 0.0
    %919 = vmatpush1.msra.mxu0 0.0
    %920 = vmatprep.subr.mxu0 0.0
    %921 = vmatpush1.msra.mxu0 0.0
    %922 = vmatprep.subr.mxu0 0.0
    %923 = vmatpush1.msra.mxu0 0.0
    %924 = vmatprep.subr.mxu0 0.0
    %925 = vmatpush1.msra.mxu0 0.0
    %926 = vmatprep.subr.mxu0 0.0
    %927 = vmatpush1.msra.mxu0 0.0
    %928 = vmatprep.subr.mxu0 0.0
    %929 = vmatpush1.msra.mxu0 0.0
    %930 = vmatprep.subr.mxu0 0.0
    %931 = vmatpush1.msra.mxu0 0.0
    %932 = vmatprep.subr.mxu0 0.0
    %933 = vmatpush1.msra.mxu0 0.0
    %934 = vmatprep.subr.mxu0 0.0
    %935 = vmatpush1.msra.mxu0 0.0
    %936 = vmatprep.subr.mxu0 0.0
    %937 = vmatpush1.msra.mxu0 0.0
    %938 = vmatprep.subr.mxu0 0.0
    %939 = vmatpush1.msra.mxu0 0.0
    %940 = vmatprep.subr.mxu0 0.0
    %941 = vmatpush1.msra.mxu0 0.0
    %942 = vmatprep.subr.mxu0 0.0
    %943 = vmatpush1.msra.mxu0 0.0
    %944 = vmatprep.subr.mxu0 0.0
    %945 = vmatpush1.msra.mxu0 0.0
    %946 = vmatprep.subr.mxu0 0.0
    %947 = vmatpush1.msra.mxu0 0.0
    %948 = vmatprep.subr.mxu0 0.0
    %949 = vmatpush1.msra.mxu0 0.0
    %950 = vmatprep.subr.mxu0 0.0
    %951 = vmatpush1.msra.mxu0 0.0
    %952 = vmatprep.subr.mxu0 0.0
    %953 = vmatpush1.msra.mxu0 0.0
    %954 = vmatprep.subr.mxu0 0.0
    %955 = vmatpush1.msra.mxu0 0.0
    %956 = vmatprep.subr.mxu0 0.0
    %957 = vmatpush1.msra.mxu0 0.0
    %958 = vmatprep.subr.mxu0 0.0
    %959 = vmatpush1.msra.mxu0 0.0
    %960 = vmatprep.subr.mxu0 0.0
    %961 = vmatpush1.msra.mxu0 0.0
    %962 = vmatprep.subr.mxu0 0.0
    %963 = vmatpush1.msra.mxu0 0.0
    %964 = vmatprep.subr.mxu0 0.0
    %965 = vmatpush1.msra.mxu0 0.0
    %966 = vmatprep.mubr.f32.mxu0 0.0
    %v967 = vand.u32 %v27, 4294901760
    %968 = vmatmul.mubr.f32.gmra.mrb[0].mxu0 %v967
    %v969 = vpop.f32.mrb[0].mxu0
    %v970 = vadd.f32 %v896, %v969
    %v971 = vpop.f32.mrb[0].mxu0
    %v972 = vadd.f32 %v898, %v971
    %973 = vdwg.mxu0
    %s974 = scalar_lea.vmem [#allocation2], 16
    %975 = vst [vmem:[%s974] sm:$0xff] %v970
    %976 = vst [vmem:[%s974 + $0x8] sm:$0xff] %v972
    // Predicated region
    $region14: #{tpu_custom_call.1} parent=1 // pred_check
      _
    $region15: #{tpu_custom_call.1} parent=1 // pred_check_branch
      %978 = sbr.rel (0) target = $region17
    $region16: #{tpu_custom_call.1} parent=1 // pred_region
      %s980 = ssub.s32 512, 512
      %981 = vsyncadd [#allocation3], %s980
      %s982 = sshll.u32 [#allocation2], 4
      %s983 = int_to_ptr.vmem [resolvable:$true] %s982
      %988 = dma.vmem_to_hbm [thread:$0]  %s983, 512, %s3, [#allocation3], 256, 256, 16
    $region17: #{tpu_custom_call.1} parent=1 // pred_fallthru
      _
    // Predicated region
    $region18: #{tpu_custom_call.1} parent=1 // pred_check
      _
    $region19: #{tpu_custom_call.1} parent=1 // pred_check_branch
      %990 = sbr.rel (0) target = $region21
    $region20: #{tpu_custom_call.1} parent=1 // pred_region
      %991 = dma.done [#allocation3], 512
    $region21: #{tpu_custom_call.1} parent=1 // pred_fallthru
      _
    %992 = vsyncpa [#allocation3], 1

</llo_original>
